<compile_context>
chip_gen: v7x
topology: tpu7x:2x2x1
jax: 0.10.0
libtpu: 0.0.40
codegen_flags: <defaults>
</compile_context>

<pallas_src>
import functools

import jax
import jax.numpy as jnp
import numpy as np
from jax.experimental import pallas as pl
from jax.experimental.pallas import tpu as pltpu


def _index_noteye_np(nodes_np):
    """nodes_np: (n,) -> (n, n-1), row j holds nodes[m] for m != j."""
    n = nodes_np.shape[0]
    return np.stack(
        [np.array([nodes_np[m] for m in range(n) if m != j], dtype=nodes_np.dtype)
         for j in range(n)],
        axis=0,
    )


def _lagrange_kernel(xm_rows, inv_dn, s, x_ref, o_ref):
    # xm_rows: tuple of n tuples of python floats (nodes[m] for m != j)
    # inv_dn : tuple of n python floats (1 / denominator_j)
    # x_ref  : VMEM (TM, S) tile of the flattened input
    # o_ref  : VMEM (TM, n*S) lane-dense output tile
    x = x_ref[...]  # (TM, S) float32
    for j, (row, inv) in enumerate(zip(xm_rows, inv_dn)):
        if row:                         # n >= 2: start from the first factor
            acc = x - row[0]
            for c in row[1:]:
                acc = acc * (x - c)
        else:                           # n == 1 edge case: empty product == 1
            acc = jnp.ones_like(x)
        o_ref[:, j * s:(j + 1) * s] = acc * inv


class LagrangeBasisPallas:
    """Pallas/TPU implementation of LagrangeBasis.forward."""

    def __init__(self, nodes_np):
        nodes_np = np.asarray(nodes_np, dtype=np.float32)
        self.n = int(nodes_np.shape[0])
        self.nodes = nodes_np
        xm = _index_noteye_np(nodes_np)                       # (n, n-1)
        dn = np.prod(nodes_np[:, None] - xm, axis=1)          # (n,) (==1 for n==1)
        # Bake constants into the kernel (immediates, no SMEM operands).
        self.xm_rows = tuple(tuple(float(v) for v in xm[j]) for j in range(self.n))
        self.inv_dn = tuple(float(1.0 / d) for d in dn)

    def __call__(self, x):
        # x: (N, D, *spatial) float32
        N, D = x.shape[0], x.shape[1]
        spatial = x.shape[2:]
        S = int(np.prod(spatial)) if len(spatial) > 0 else 1
        n = self.n
        ND = N * D

        x_flat = jnp.reshape(x, (ND, S)).astype(jnp.float32)

        # Row tile: largest multiple of 8 that keeps the double-buffered
        # in+out blocks under ~32 MiB (safe on v5e/v6e/v7x), capped at 512 and
        # at round_up(ND, 8) so tiny inputs are not over-padded.
        budget = 32 * 1024 * 1024
        per_row_bytes = (1 + n) * S * 4
        tm = budget // (2 * per_row_bytes)
        tm = max(8, min(512, (tm // 8) * 8, ((ND + 7) // 8) * 8))

        nd_pad = ((ND + tm - 1) // tm) * tm
        if nd_pad != ND:
            # Row-only pad (S stays unpadded and lane-dense).
            x_flat = jnp.pad(x_flat, ((0, nd_pad - ND), (0, 0)))

        block_bytes = (1 + n) * tm * S * 4
        vmem_limit = 48 * 1024 * 1024
        if 2 * block_bytes + (4 << 20) > vmem_limit:
            # TODO(synk): extremely large spatial size S; an S grid axis would
            # be needed to stay within v7x's 64 MiB physical VMEM.
            vmem_limit = 2 * block_bytes + (4 << 20)

        kernel = functools.partial(_lagrange_kernel, self.xm_rows, self.inv_dn, S)

        out = pl.pallas_call(
            kernel,
            out_shape=jax.ShapeDtypeStruct((nd_pad, n * S), jnp.float32),
            grid_spec=pltpu.PrefetchScalarGridSpec(
                num_scalar_prefetch=0,
                grid=(nd_pad // tm,),
                in_specs=[pl.BlockSpec((tm, S), lambda i: (i, 0))],
                out_specs=pl.BlockSpec((tm, n * S), lambda i: (i, 0)),
            ),
            compiler_params=pltpu.CompilerParams(
                dimension_semantics=("parallel",),
                vmem_limit_bytes=int(vmem_limit),
            ),
        )(x_flat)

        if nd_pad != ND:
            out = out[:ND]
        # (ND, n*S) row-major is identical to (ND, n, S) row-major: free reshape.
        return jnp.reshape(out, (N, D, n) + spatial)


def _reference(x, nodes_np):
    """Pure-JAX reference mirroring the PyTorch forward."""
    xm = jnp.asarray(_index_noteye_np(nodes_np))                # (n, n-1)
    dn = jnp.asarray(np.prod(nodes_np[:, None] - _index_noteye_np(nodes_np), axis=1))
    N, D = x.shape[0], x.shape[1]
    spatial = x.shape[2:]
    xf = jnp.reshape(x, (N, D, 1, 1, -1))                       # (N,D,1,1,S)
    xm_b = xm[None, None, :, :, None]                           # (1,1,n,n-1,1)
    out = jnp.prod(xf - xm_b, axis=3) / dn[None, None, :, None] # (N,D,n,S)
    return jnp.reshape(out, (N, D, xm.shape[0]) + spatial)


if __name__ == "__main__":
    key = jax.random.PRNGKey(0)

    # Deterministic nodes (5 Chebyshev-like nodes on [-1, 1]).
    n_nodes = 5
    nodes_np = np.cos(np.pi * (np.arange(n_nodes) + 0.5) / n_nodes).astype(np.float32)

    basis = LagrangeBasisPallas(nodes_np)

    # Small input consistent with forward: X of size (N, D, H, W).
    N, D, H, W = 2, 4, 16, 16
    x = jax.random.normal(key, (N, D, H, W), dtype=jnp.float32)

    out = basis(x)
    out = jax.block_until_ready(out)

    ref = jax.block_until_ready(_reference(x, nodes_np))
    assert out.shape == (N, D, n_nodes, H, W), out.shape
    np.testing.assert_allclose(np.asarray(out), np.asarray(ref), rtol=1e-5, atol=1e-5)

    print("KERNEL_OK")
</pallas_src>

<mosaic_0001>
module attributes {stable_mosaic.version = 11 : i64} {
  func.func @_lagrange_kernel(%arg0: i32, %arg1: memref<8x256xf32, #tpu.memory_space<vmem>>, %arg2: memref<8x1280xf32, #tpu.memory_space<vmem>>) attributes {dimension_semantics = [#tpu.dimension_semantics<parallel>], iteration_bounds = array<i64: 1>, scalar_prefetch = 0 : i64, scratch_operands = 0 : i64, tpu.core_type = #tpu.core_type<tc>, window_params = [{transform_indices = @transform_0, window_bounds = array<i64: 8, 256>}, {transform_indices = @transform_1, window_bounds = array<i64: 8, 1280>}]} {
    %c0 = arith.constant 0 : index
    %c0_0 = arith.constant 0 : index
    %0 = vector.load %arg1[%c0, %c0_0] : memref<8x256xf32, #tpu.memory_space<vmem>>, vector<8x256xf32>
    %cst = arith.constant 0.587785244 : f32
    %1 = vector.broadcast %cst : f32 to vector<8x256xf32>
    %2 = arith.subf %0, %1 : vector<8x256xf32>
    %cst_1 = arith.constant 6.12323426E-17 : f32
    %3 = vector.broadcast %cst_1 : f32 to vector<8x256xf32>
    %4 = arith.subf %0, %3 : vector<8x256xf32>
    %5 = arith.mulf %2, %4 : vector<8x256xf32>
    %cst_2 = arith.constant -0.587785244 : f32
    %6 = vector.broadcast %cst_2 : f32 to vector<8x256xf32>
    %7 = arith.subf %0, %6 : vector<8x256xf32>
    %8 = arith.mulf %5, %7 : vector<8x256xf32>
    %cst_3 = arith.constant -0.95105654 : f32
    %9 = vector.broadcast %cst_3 : f32 to vector<8x256xf32>
    %10 = arith.subf %0, %9 : vector<8x256xf32>
    %11 = arith.mulf %8, %10 : vector<8x256xf32>
    %cst_4 = arith.constant 0.988854289 : f32
    %12 = vector.broadcast %cst_4 : f32 to vector<8x256xf32>
    %13 = arith.mulf %11, %12 : vector<8x256xf32>
    %c0_5 = arith.constant 0 : index
    %c0_6 = arith.constant 0 : index
    %14 = vector.load %arg2[%c0_5, %c0_6] : memref<8x1280xf32, #tpu.memory_space<vmem>>, vector<8x256xf32>
    tpu.vector_store %arg2[%c0_5, %c0_6], %13 {strides = array<i32>} : memref<8x1280xf32, #tpu.memory_space<vmem>>, vector<8x256xf32>,
    %cst_7 = arith.constant 0.95105654 : f32
    %15 = vector.broadcast %cst_7 : f32 to vector<8x256xf32>
    %16 = arith.subf %0, %15 : vector<8x256xf32>
    %cst_8 = arith.constant 6.12323426E-17 : f32
    %17 = vector.broadcast %cst_8 : f32 to vector<8x256xf32>
    %18 = arith.subf %0, %17 : vector<8x256xf32>
    %19 = arith.mulf %16, %18 : vector<8x256xf32>
    %cst_9 = arith.constant -0.587785244 : f32
    %20 = vector.broadcast %cst_9 : f32 to vector<8x256xf32>
    %21 = arith.subf %0, %20 : vector<8x256xf32>
    %22 = arith.mulf %19, %21 : vector<8x256xf32>
    %cst_10 = arith.constant -0.95105654 : f32
    %23 = vector.broadcast %cst_10 : f32 to vector<8x256xf32>
    %24 = arith.subf %0, %23 : vector<8x256xf32>
    %25 = arith.mulf %22, %24 : vector<8x256xf32>
    %cst_11 = arith.constant -2.58885431 : f32
    %26 = vector.broadcast %cst_11 : f32 to vector<8x256xf32>
    %27 = arith.mulf %25, %26 : vector<8x256xf32>
    %c0_12 = arith.constant 0 : index
    %c256 = arith.constant 256 : index
    %28 = vector.load %arg2[%c0_12, %c256] : memref<8x1280xf32, #tpu.memory_space<vmem>>, vector<8x256xf32>
    tpu.vector_store %arg2[%c0_12, %c256], %27 {strides = array<i32>} : memref<8x1280xf32, #tpu.memory_space<vmem>>, vector<8x256xf32>,
    %cst_13 = arith.constant 0.95105654 : f32
    %29 = vector.broadcast %cst_13 : f32 to vector<8x256xf32>
    %30 = arith.subf %0, %29 : vector<8x256xf32>
    %cst_14 = arith.constant 0.587785244 : f32
    %31 = vector.broadcast %cst_14 : f32 to vector<8x256xf32>
    %32 = arith.subf %0, %31 : vector<8x256xf32>
    %33 = arith.mulf %30, %32 : vector<8x256xf32>
    %cst_15 = arith.constant -0.587785244 : f32
    %34 = vector.broadcast %cst_15 : f32 to vector<8x256xf32>
    %35 = arith.subf %0, %34 : vector<8x256xf32>
    %36 = arith.mulf %33, %35 : vector<8x256xf32>
    %cst_16 = arith.constant -0.95105654 : f32
    %37 = vector.broadcast %cst_16 : f32 to vector<8x256xf32>
    %38 = arith.subf %0, %37 : vector<8x256xf32>
    %39 = arith.mulf %36, %38 : vector<8x256xf32>
    %cst_17 = arith.constant 3.19999981 : f32
    %40 = vector.broadcast %cst_17 : f32 to vector<8x256xf32>
    %41 = arith.mulf %39, %40 : vector<8x256xf32>
    %c0_18 = arith.constant 0 : index
    %c512 = arith.constant 512 : index
    %42 = vector.load %arg2[%c0_18, %c512] : memref<8x1280xf32, #tpu.memory_space<vmem>>, vector<8x256xf32>
    tpu.vector_store %arg2[%c0_18, %c512], %41 {strides = array<i32>} : memref<8x1280xf32, #tpu.memory_space<vmem>>, vector<8x256xf32>,
    %cst_19 = arith.constant 0.95105654 : f32
    %43 = vector.broadcast %cst_19 : f32 to vector<8x256xf32>
    %44 = arith.subf %0, %43 : vector<8x256xf32>
    %cst_20 = arith.constant 0.587785244 : f32
    %45 = vector.broadcast %cst_20 : f32 to vector<8x256xf32>
    %46 = arith.subf %0, %45 : vector<8x256xf32>
    %47 = arith.mulf %44, %46 : vector<8x256xf32>
    %cst_21 = arith.constant 6.12323426E-17 : f32
    %48 = vector.broadcast %cst_21 : f32 to vector<8x256xf32>
    %49 = arith.subf %0, %48 : vector<8x256xf32>
    %50 = arith.mulf %47, %49 : vector<8x256xf32>
    %cst_22 = arith.constant -0.95105654 : f32
    %51 = vector.broadcast %cst_22 : f32 to vector<8x256xf32>
    %52 = arith.subf %0, %51 : vector<8x256xf32>
    %53 = arith.mulf %50, %52 : vector<8x256xf32>
    %cst_23 = arith.constant -2.58885431 : f32
    %54 = vector.broadcast %cst_23 : f32 to vector<8x256xf32>
    %55 = arith.mulf %53, %54 : vector<8x256xf32>
    %c0_24 = arith.constant 0 : index
    %c768 = arith.constant 768 : index
    %56 = vector.load %arg2[%c0_24, %c768] : memref<8x1280xf32, #tpu.memory_space<vmem>>, vector<8x256xf32>
    tpu.vector_store %arg2[%c0_24, %c768], %55 {strides = array<i32>} : memref<8x1280xf32, #tpu.memory_space<vmem>>, vector<8x256xf32>,
    %cst_25 = arith.constant 0.95105654 : f32
    %57 = vector.broadcast %cst_25 : f32 to vector<8x256xf32>
    %58 = arith.subf %0, %57 : vector<8x256xf32>
    %cst_26 = arith.constant 0.587785244 : f32
    %59 = vector.broadcast %cst_26 : f32 to vector<8x256xf32>
    %60 = arith.subf %0, %59 : vector<8x256xf32>
    %61 = arith.mulf %58, %60 : vector<8x256xf32>
    %cst_27 = arith.constant 6.12323426E-17 : f32
    %62 = vector.broadcast %cst_27 : f32 to vector<8x256xf32>
    %63 = arith.subf %0, %62 : vector<8x256xf32>
    %64 = arith.mulf %61, %63 : vector<8x256xf32>
    %cst_28 = arith.constant -0.587785244 : f32
    %65 = vector.broadcast %cst_28 : f32 to vector<8x256xf32>
    %66 = arith.subf %0, %65 : vector<8x256xf32>
    %67 = arith.mulf %64, %66 : vector<8x256xf32>
    %cst_29 = arith.constant 0.988854289 : f32
    %68 = vector.broadcast %cst_29 : f32 to vector<8x256xf32>
    %69 = arith.mulf %67, %68 : vector<8x256xf32>
    %c0_30 = arith.constant 0 : index
    %c1024 = arith.constant 1024 : index
    %70 = vector.load %arg2[%c0_30, %c1024] : memref<8x1280xf32, #tpu.memory_space<vmem>>, vector<8x256xf32>
    tpu.vector_store %arg2[%c0_30, %c1024], %69 {strides = array<i32>} : memref<8x1280xf32, #tpu.memory_space<vmem>>, vector<8x256xf32>,
    return
  }
  func.func @transform_0(%arg0: i32) -> (i32, i32) {
    %c0_i32 = arith.constant 0 : i32
    %c0_i32_0 = arith.constant 0 : i32
    return %arg0, %c0_i32 : i32, i32
  }
  func.func @transform_1(%arg0: i32) -> (i32, i32) {
    %c0_i32 = arith.constant 0 : i32
    %c0_i32_0 = arith.constant 0 : i32
    return %arg0, %c0_i32 : i32, i32
  }
}

</mosaic_0001>

<llo_original>
// kernel: tpu_custom_call.1
$region0: #{tpu_custom_call.1}
  #allocation0 [shape = 'u32[]', space=smem, size = 0x4, offset = 0x4, fixed_abs, tag = 'smem constant byte address 0x4 - core index']
  #allocation1 [shape = 'u32[144,128]{1,0:T(1,128)}', space=vmem, size = 0x12000, scoped, tag = 'internal scratch']
  %s0 = inlined_call_operand.hbm [shape: f32[8,256], index: 0, kind: input, shape index: {}]
  %s1 = inlined_call_operand.hbm [shape: f32[8,1280], index: 1, kind: output, shape index: {}]
  %s2 = sld [smem:[#allocation0]]
  $region18: #{tpu_custom_call.1} parent=0
    _
  %s4 = ssub.s32 1, %s2
  %s5 = scalar_select 0, %s4, %s2
  $region1: #{tpu_custom_call.1} parent=0
    #allocation2 [shape = 'u8[8192]{0}', space=vmem, size = 0x2000, scoped, tag = 'input window, operand 0, single buffered']
    #allocation3 [shape = 's32[1]{0}', space=sflag, size = 0x4, scoped, tag = 'scoped memory for tpu_custom_call.1']
    #allocation4 [shape = 's32[1]{0}', space=sflag, size = 0x4, scoped, tag = 'scoped memory for tpu_custom_call.1']
    #allocation5 [shape = 'u8[40960]{0}', space=vmem, size = 0xa000, scoped, tag = 'output window, operand 0, single buffered']
    %6 = vsyncpa [#allocation3], 0
    %7 = vsyncpa [#allocation4], 0
    // Predicated region
    $region2: #{tpu_custom_call.1} parent=1 // pred_check
      _
    $region3: #{tpu_custom_call.1} parent=1 // pred_check_branch
      %9 = sbr.rel (0) target = $region5
    $region4: #{tpu_custom_call.1} parent=1 // pred_region
      %s11 = ssub.s32 256, 256
      %12 = vsyncadd [#allocation3], %s11
      %s14 = sshll.u32 [#allocation2], 4
      %s15 = int_to_ptr.vmem [resolvable:$true] %s14
      %17 = dma.hbm_to_vmem [thread:$0]  %s0, 256, %s15, [#allocation3]
    $region5: #{tpu_custom_call.1} parent=1 // pred_fallthru
      _
    // Predicated region
    $region6: #{tpu_custom_call.1} parent=1 // pred_check
      _
    $region7: #{tpu_custom_call.1} parent=1 // pred_check_branch
      %19 = sbr.rel (0) target = $region9
    $region8: #{tpu_custom_call.1} parent=1 // pred_region
      %20 = dma.done [#allocation3], 256
    $region9: #{tpu_custom_call.1} parent=1 // pred_fallthru
      _
    %v21 = vld [vmem:[#allocation2] sm:$0xff]
    %v22 = vld [vmem:[#allocation2 + $0x8] sm:$0xff]
    %v23 = vsub.f32 %v21, 0.58778524
    %v24 = vsub.f32 %v22, 0.58778524
    %v25 = vsub.f32 %v21, 6.123234e-17
    %v26 = vsub.f32 %v22, 6.123234e-17
    %v27 = vmul.f32 %v23, %v25
    %v28 = vmul.f32 %v24, %v26
    %v29 = vsub.f32 %v21, -0.58778524
    %v30 = vsub.f32 %v22, -0.58778524
    %v31 = vmul.f32 %v27, %v29
    %v32 = vmul.f32 %v28, %v30
    %v33 = vsub.f32 %v21, -0.95105654
    %v34 = vsub.f32 %v22, -0.95105654
    %v35 = vmul.f32 %v31, %v33
    %v36 = vmul.f32 %v32, %v34
    %v37 = vmul.f32 %v35, 0.9888543
    %v38 = vmul.f32 %v36, 0.9888543
    %39 = vst [vmem:[#allocation5] sm:$0xff] %v37
    %40 = vst [vmem:[#allocation5 + $0x8] sm:$0xff] %v38
    %v41 = vsub.f32 %v21, 0.95105654
    %v42 = vsub.f32 %v22, 0.95105654
    %v43 = vmul.f32 %v41, %v25
    %v44 = vmul.f32 %v42, %v26
    %v45 = vmul.f32 %v43, %v29
    %v46 = vmul.f32 %v44, %v30
    %v47 = vmul.f32 %v45, %v33
    %v48 = vmul.f32 %v46, %v34
    %v49 = vmul.f32 %v47, -2.5888543
    %v50 = vmul.f32 %v48, -2.5888543
    %51 = vst [vmem:[#allocation5 + $0x10] sm:$0xff] %v49
    %52 = vst [vmem:[#allocation5 + $0x18] sm:$0xff] %v50
    %v53 = vmul.f32 %v41, %v23
    %v54 = vmul.f32 %v42, %v24
    %v55 = vmul.f32 %v53, %v29
    %v56 = vmul.f32 %v54, %v30
    %v57 = vmul.f32 %v55, %v33
    %v58 = vmul.f32 %v56, %v34
    %v59 = vmul.f32 %v57, 3.1999998
    %v60 = vmul.f32 %v58, 3.1999998
    %61 = vst [vmem:[#allocation5 + $0x20] sm:$0xff] %v59
    %62 = vst [vmem:[#allocation5 + $0x28] sm:$0xff] %v60
    %v63 = vmul.f32 %v53, %v25
    %v64 = vmul.f32 %v54, %v26
    %v65 = vmul.f32 %v63, %v33
    %v66 = vmul.f32 %v64, %v34
    %v67 = vmul.f32 %v65, -2.5888543
    %v68 = vmul.f32 %v66, -2.5888543
    %69 = vst [vmem:[#allocation5 + $0x30] sm:$0xff] %v67
    %70 = vst [vmem:[#allocation5 + $0x38] sm:$0xff] %v68
    %v71 = vmul.f32 %v63, %v29
    %v72 = vmul.f32 %v64, %v30
    %v73 = vmul.f32 %v71, 0.9888543
    %v74 = vmul.f32 %v72, 0.9888543
    %75 = vst [vmem:[#allocation5 + $0x40] sm:$0xff] %v73
    %76 = vst [vmem:[#allocation5 + $0x48] sm:$0xff] %v74
    // Predicated region
    $region10: #{tpu_custom_call.1} parent=1 // pred_check
      _
    $region11: #{tpu_custom_call.1} parent=1 // pred_check_branch
      %78 = sbr.rel (0) target = $region13
    $region12: #{tpu_custom_call.1} parent=1 // pred_region
      %s80 = ssub.s32 1280, 1280
      %81 = vsyncadd [#allocation4], %s80
      %s83 = sshll.u32 [#allocation5], 4
      %s84 = int_to_ptr.vmem [resolvable:$true] %s83
      %86 = dma.vmem_to_hbm [thread:$0]  %s84, 1280, %s1, [#allocation4]
    $region13: #{tpu_custom_call.1} parent=1 // pred_fallthru
      _
    // Predicated region
    $region14: #{tpu_custom_call.1} parent=1 // pred_check
      _
    $region15: #{tpu_custom_call.1} parent=1 // pred_check_branch
      %88 = sbr.rel (0) target = $region17
    $region16: #{tpu_custom_call.1} parent=1 // pred_region
      %89 = dma.done [#allocation4], 1280
    $region17: #{tpu_custom_call.1} parent=1 // pred_fallthru
      _
    %90 = vsyncpa [#allocation3], 1
    %91 = vsyncpa [#allocation4], 1

</llo_original>
